<compile_context>
chip_gen: v5e
topology: v5e:2x2
jax: 0.10.0
libtpu: 0.0.40
codegen_flags: <defaults>
</compile_context>

<pallas_src>
import functools
import math

import jax
import jax.numpy as jnp
from jax import lax
from jax.experimental import pallas as pl
from jax.experimental.pallas import tpu as pltpu

BN_EPS = 1e-5

_PASS_A_BLOCK_BYTES = 2 * 1024 * 1024   # f32 bytes per (C, TL) feat block, pass A
_PASS_B_BLOCK_BYTES = 4 * 1024 * 1024   # f32 bytes per (C, TL) feat/out block, pass B
_VMEM_LIMIT_BYTES = 40 * 1024 * 1024    # > v5e 16 MiB scoped default, < v7x 64 MiB physical


def _round_up(x, m):
    return (x + m - 1) // m * m


def _pick_l_tile(L, C, block_bytes):
    """Largest lane-dense (multiple-of-128) L tile whose VMEM-padded f32 block fits."""
    c_pad = _round_up(max(C, 1), 8)                       # f32 sublane padding in VMEM
    lanes = max(128, (block_bytes // (4 * c_pad)) // 128 * 128)
    if L <= lanes:
        return L                                          # one full-L block (always legal)
    return lanes                                          # ragged last tile handled by masking


# ----------------------------------------------------------------------------
# Pass A: 1x1 conv (BN folded, bias hoisted) + masked partial sum / max over L.
# grid = (B, cdiv(L, TL)); outputs are (B, C, 1) sum and max accumulated in VMEM.
# ----------------------------------------------------------------------------
def reduce_kernel(feat_ref, wc_ref, sum_ref, max_ref, *, seq_len, l_tile):
    l = pl.program_id(1)

    # In-kernel bf16 cast of the streamed f32 block (no wrapper-side cast pass).
    feat = feat_ref[0].astype(jnp.bfloat16)                              # (C, TL)
    conv = jnp.dot(wc_ref[...], feat, preferred_element_type=jnp.float32)  # (C, TL) f32

    # Mask lanes beyond the true sequence length (ragged last tile).
    lane = lax.broadcasted_iota(jnp.int32, conv.shape, 1)
    valid = lane < (seq_len - l * l_tile)

    psum = jnp.sum(jnp.where(valid, conv, 0.0), axis=1, keepdims=True)       # (C, 1)
    pmax = jnp.max(jnp.where(valid, conv, -jnp.inf), axis=1, keepdims=True)  # (C, 1)

    @pl.when(l == 0)
    def _():
        sum_ref[0] = jnp.zeros(sum_ref.shape[1:], jnp.float32)
        max_ref[0] = jnp.full(max_ref.shape[1:], -jnp.inf, jnp.float32)

    sum_ref[0] = sum_ref[0] + psum
    max_ref[0] = jnp.maximum(max_ref[0], pmax)


# ----------------------------------------------------------------------------
# Pass B: squeeze-excite MLP (once per batch, pl.when(l==0) -> scratch) and the
# broadcast residual add streamed over L tiles:  out = att + feat.
# The folded conv+BN bias is applied here to the pooled stats (hoisted from A).
# ----------------------------------------------------------------------------
def apply_kernel(sum_ref, max_ref, bc_ref, w1_ref, b1_ref, w2_ref, b2_ref,
                 feat_ref, out_ref, att_ref, *, inv_len):
    l = pl.program_id(1)

    @pl.when(l == 0)
    def _():
        # Channel-column form: x is (C, 1); PyTorch (out, in) weights used as
        # W @ x, so no transposes are needed.
        def mlp(x):
            h = jnp.dot(w1_ref[...], x,
                        preferred_element_type=jnp.float32) + b1_ref[...]
            h = jnp.maximum(h, 0.0)
            return jnp.dot(w2_ref[...], h,
                           preferred_element_type=jnp.float32) + b2_ref[...]

        # sum/max of (conv + bc) == sum(conv) + L*bc / max(conv) + bc.
        avg = sum_ref[0] * inv_len + bc_ref[...]          # (C, 1)
        mx = max_ref[0] + bc_ref[...]                     # (C, 1)
        att_ref[...] = jax.nn.sigmoid(mlp(avg) + mlp(mx))

    # NOTE: `y = att * original_out` in the reference is dead code; skipped.
    out_ref[0] = feat_ref[0] + att_ref[...]               # (C, TL) + (C, 1)


# ----------------------------------------------------------------------------
# Wrapper
# ----------------------------------------------------------------------------
@functools.partial(jax.jit, static_argnames=("block_bytes_a", "block_bytes_b"))
def loab_forward(feat_ncl, params, *,
                 block_bytes_a=_PASS_A_BLOCK_BYTES,
                 block_bytes_b=_PASS_B_BLOCK_BYTES):
    """feat_ncl: (B, C, L) float32, PyTorch NCL layout (kept end-to-end)."""
    B, C, L = feat_ncl.shape
    C2 = params["w1"].shape[0]
    feat_f32 = feat_ncl.astype(jnp.float32)

    # Fold BatchNorm (inference, running stats) into the 1x1 conv.
    scale = params["gamma"] * lax.rsqrt(params["var"] + BN_EPS)          # (C,)
    wc = (scale[:, None] * params["wconv"]).astype(jnp.bfloat16)         # (C, C)
    bc = (scale * params["bconv"] + params["beta"]
          - scale * params["mean"]).reshape(C, 1).astype(jnp.float32)    # (C, 1)

    w1 = params["w1"].astype(jnp.float32)                 # (C2, C)
    b1 = params["b1"].reshape(C2, 1).astype(jnp.float32)  # (C2, 1)
    w2 = params["w2"].astype(jnp.float32)                 # (C, C2)
    b2 = params["b2"].reshape(C, 1).astype(jnp.float32)   # (C, 1)

    TL_A = _pick_l_tile(L, C, block_bytes_a)
    TL_B = _pick_l_tile(L, C, block_bytes_b)
    nL_A = pl.cdiv(L, TL_A)
    nL_B = pl.cdiv(L, TL_B)

    compiler_params = pltpu.CompilerParams(
        dimension_semantics=("parallel", "arbitrary"),
        vmem_limit_bytes=_VMEM_LIMIT_BYTES)

    # ---- pass A: conv(+BN, bias hoisted) and masked sum/max pooling over L ----
    cost_a = pl.CostEstimate(
        flops=2 * B * C * C * L + 4 * B * C * L,
        transcendentals=0,
        bytes_accessed=4 * B * C * L + 2 * C * C + 8 * B * C)

    sum_o, max_o = pl.pallas_call(
        functools.partial(reduce_kernel, seq_len=L, l_tile=TL_A),
        out_shape=(jax.ShapeDtypeStruct((B, C, 1), jnp.float32),
                   jax.ShapeDtypeStruct((B, C, 1), jnp.float32)),
        grid_spec=pltpu.PrefetchScalarGridSpec(
            num_scalar_prefetch=0,
            grid=(B, nL_A),
            in_specs=[
                pl.BlockSpec((1, C, TL_A), lambda b, l: (b, 0, l)),  # feat f32
                pl.BlockSpec((C, C), lambda b, l: (0, 0)),           # folded W (bf16)
            ],
            out_specs=[
                pl.BlockSpec((1, C, 1), lambda b, l: (b, 0, 0)),     # sum acc
                pl.BlockSpec((1, C, 1), lambda b, l: (b, 0, 0)),     # max acc
            ],
        ),
        compiler_params=compiler_params,
        cost_estimate=cost_a,
    )(feat_f32, wc)

    # ---- pass B: per-batch MLP + broadcast residual add ----------------------
    cost_b = pl.CostEstimate(
        flops=B * C * L + 8 * B * C * C2 + 6 * B * C,
        transcendentals=B * C,
        bytes_accessed=8 * B * C * L + 8 * B * C)

    out = pl.pallas_call(
        functools.partial(apply_kernel, inv_len=1.0 / L),
        out_shape=jax.ShapeDtypeStruct((B, C, L), jnp.float32),
        grid_spec=pltpu.PrefetchScalarGridSpec(
            num_scalar_prefetch=0,
            grid=(B, nL_B),
            in_specs=[
                pl.BlockSpec((1, C, 1), lambda b, l: (b, 0, 0)),     # sum
                pl.BlockSpec((1, C, 1), lambda b, l: (b, 0, 0)),     # max
                pl.BlockSpec((C, 1), lambda b, l: (0, 0)),           # folded bias
                pl.BlockSpec((C2, C), lambda b, l: (0, 0)),          # w1
                pl.BlockSpec((C2, 1), lambda b, l: (0, 0)),          # b1
                pl.BlockSpec((C, C2), lambda b, l: (0, 0)),          # w2
                pl.BlockSpec((C, 1), lambda b, l: (0, 0)),           # b2
                pl.BlockSpec((1, C, TL_B), lambda b, l: (b, 0, l)),  # feat f32
            ],
            out_specs=pl.BlockSpec((1, C, TL_B), lambda b, l: (b, 0, l)),
            scratch_shapes=[pltpu.VMEM((C, 1), jnp.float32)],        # att
        ),
        compiler_params=compiler_params,
        cost_estimate=cost_b,
    )(sum_o, max_o, bc, w1, b1, w2, b2, feat_f32)

    return out


# ----------------------------------------------------------------------------
# Deterministic PyTorch-shaped params + pure-JAX reference (for sanity check)
# ----------------------------------------------------------------------------
def init_params(in_channels: int, key):
    C = in_channels
    C2 = round(C / 2)
    ks = jax.random.split(key, 6)

    def u(k, shape, fan_in):
        bound = 1.0 / math.sqrt(fan_in)
        return jax.random.uniform(k, shape, jnp.float32, -bound, bound)

    return {
        "wconv": u(ks[0], (C, C), C),        # Conv1d(C, C, k=1) weight (C, C, 1) -> (C, C)
        "bconv": u(ks[1], (C,), C),
        "gamma": jnp.linspace(0.9, 1.1, C, dtype=jnp.float32),
        "beta": jnp.linspace(-0.1, 0.1, C, dtype=jnp.float32),
        "mean": jnp.zeros((C,), jnp.float32),   # BN running stats (inference mode)
        "var": jnp.ones((C,), jnp.float32),
        "w1": u(ks[2], (C2, C), C),          # Linear(C -> C2)
        "b1": u(ks[3], (C2,), C),
        "w2": u(ks[4], (C, C2), C2),         # Linear(C2 -> C)
        "b2": u(ks[5], (C,), C2),
    }


def loab_reference(feat, params):
    scale = params["gamma"] / jnp.sqrt(params["var"] + BN_EPS)
    w = scale[:, None] * params["wconv"]
    b = scale * params["bconv"] + params["beta"] - scale * params["mean"]
    conv = jnp.einsum("oc,bcl->bol", w, feat) + b[None, :, None]
    avg = jnp.mean(conv, axis=2)
    mx = jnp.max(conv, axis=2)

    def mlp(x):
        h = jax.nn.relu(x @ params["w1"].T + params["b1"])
        return h @ params["w2"].T + params["b2"]

    att = jax.nn.sigmoid(mlp(avg) + mlp(mx))
    return att[:, :, None] + feat


if __name__ == "__main__":
    key = jax.random.PRNGKey(0)
    k_x, k_x2, k_p = jax.random.split(key, 3)

    B, C, L = 2, 4, 16  # small shapes: batch=2, in_channels=4, seq_len=16
    params = init_params(C, k_p)

    # Main small-shape check (single full-L block per pass).
    feat = jax.random.normal(k_x, (B, C, L), jnp.float32)
    out = loab_forward(feat, params,
                       block_bytes_a=_PASS_A_BLOCK_BYTES,
                       block_bytes_b=_PASS_B_BLOCK_BYTES)
    jax.block_until_ready(out)
    assert out.shape == (B, C, L) and out.dtype == jnp.float32
    ref = loab_reference(feat, params)
    assert jnp.allclose(out, ref, atol=1e-2, rtol=1e-2), "mismatch vs f32 reference"

    # Exercise the new cdiv grid + ragged-tile masking path by forcing tiny
    # (128-lane) blocks on a non-multiple-of-128 sequence length.
    L2 = 300
    feat2 = jax.random.normal(k_x2, (B, C, L2), jnp.float32)
    out2 = loab_forward(feat2, params,
                        block_bytes_a=4 * 8 * 128,
                        block_bytes_b=4 * 8 * 128)
    jax.block_until_ready(out2)
    ref2 = loab_reference(feat2, params)
    assert jnp.allclose(out2, ref2, atol=1e-2, rtol=1e-2), "mismatch on ragged-tile path"

    print("KERNEL_OK")
</pallas_src>

<mosaic_0001>
module attributes {stable_mosaic.version = 11 : i64} {
  func.func @reduce_kernel(%arg0: i32, %arg1: i32, %arg2: memref<1x4x16xf32, #tpu.memory_space<vmem>>, %arg3: memref<4x4xbf16, #tpu.memory_space<vmem>>, %arg4: memref<1x4x1xf32, #tpu.memory_space<vmem>>, %arg5: memref<1x4x1xf32, #tpu.memory_space<vmem>>) attributes {dimension_semantics = [#tpu.dimension_semantics<parallel>, #tpu.dimension_semantics<arbitrary>], iteration_bounds = array<i64: 2, 1>, scalar_prefetch = 0 : i64, scratch_operands = 0 : i64, tpu.core_type = #tpu.core_type<tc>, window_params = [{transform_indices = @transform_0, window_bounds = array<i64: 1, 4, 16>}, {pipeline_mode = #tpu.pipeline_mode<synchronous>, transform_indices = @transform_1, window_bounds = array<i64: 4, 4>}, {transform_indices = @transform_2, window_bounds = array<i64: 1, 4, 1>}, {transform_indices = @transform_3, window_bounds = array<i64: 1, 4, 1>}]} {
    %c0 = arith.constant 0 : index
    %c0_0 = arith.constant 0 : index
    %c0_1 = arith.constant 0 : index
    %0 = vector.load %arg2[%c0, %c0_0, %c0_1] : memref<1x4x16xf32, #tpu.memory_space<vmem>>, vector<1x4x16xf32>
    %1 = vector.shape_cast %0 : vector<1x4x16xf32> to vector<4x16xf32>
    %2 = arith.truncf %1 : vector<4x16xf32> to vector<4x16xbf16>
    %c0_2 = arith.constant 0 : index
    %c0_3 = arith.constant 0 : index
    %3 = vector.load %arg3[%c0_2, %c0_3] : memref<4x4xbf16, #tpu.memory_space<vmem>>, vector<4x4xbf16>
    %cst = arith.constant dense<0.000000e+00> : vector<4x16xf32>
    %4 = tpu.matmul %3, %2, %cst {dimension_numbers = #tpu.dot_dimension_numbers<[1], [0], [0], [1], [0, 0, 1, 1], [], []>} : vector<4x4xbf16>, vector<4x16xbf16>, vector<4x16xf32> -> vector<4x16xf32>
    %5 = tpu.iota {dimensions = array<i32: 1>} : vector<4x16xi32>
    %c16_i32 = arith.constant 16 : i32
    %6 = arith.muli %arg1, %c16_i32 : i32
    %c16_i32_4 = arith.constant 16 : i32
    %7 = arith.subi %c16_i32_4, %6 : i32
    %8 = vector.broadcast %7 : i32 to vector<4x16xi32>
    %9 = arith.cmpi slt, %5, %8 : vector<4x16xi32>
    %cst_5 = arith.constant 0.000000e+00 : f32
    %10 = vector.broadcast %cst_5 : f32 to vector<4x16xf32>
    %11 = arith.select %9, %4, %10 : vector<4x16xi1>, vector<4x16xf32>
    %cst_6 = arith.constant dense<0.000000e+00> : vector<4xf32>
    %12 = vector.multi_reduction <add>, %11, %cst_6 [1] : vector<4x16xf32> to vector<4xf32>
    %13 = vector.shape_cast %12 : vector<4xf32> to vector<4x1xf32>
    %cst_7 = arith.constant 0xFF800000 : f32
    %14 = vector.broadcast %cst_7 : f32 to vector<4x16xf32>
    %15 = arith.select %9, %4, %14 : vector<4x16xi1>, vector<4x16xf32>
    %cst_8 = arith.constant dense<0xFF800000> : vector<4xf32>
    %16 = vector.multi_reduction <maximumf>, %15, %cst_8 [1] : vector<4x16xf32> to vector<4xf32>
    %17 = vector.shape_cast %16 : vector<4xf32> to vector<4x1xf32>
    %c0_i32 = arith.constant 0 : i32
    %18 = arith.cmpi eq, %arg1, %c0_i32 : i32
    %19 = arith.extui %18 : i1 to i32
    %c0_i32_9 = arith.constant 0 : i32
    %20 = arith.cmpi ne, %19, %c0_i32_9 : i32
    scf.if %20 {
      %cst_22 = arith.constant 0.000000e+00 : f32
      %33 = vector.broadcast %cst_22 : f32 to vector<4x1xf32>
      %c0_23 = arith.constant 0 : index
      %c0_24 = arith.constant 0 : index
      %c0_25 = arith.constant 0 : index
      %34 = vector.load %arg4[%c0_23, %c0_24, %c0_25] : memref<1x4x1xf32, #tpu.memory_space<vmem>>, vector<1x4x1xf32>
      %35 = vector.shape_cast %34 : vector<1x4x1xf32> to vector<4x1xf32>
      %36 = vector.shape_cast %33 : vector<4x1xf32> to vector<1x4x1xf32>
      tpu.vector_store %arg4[%c0_23, %c0_24, %c0_25], %36 {strides = array<i32>} : memref<1x4x1xf32, #tpu.memory_space<vmem>>, vector<1x4x1xf32>,
      %cst_26 = arith.constant 0xFF800000 : f32
      %37 = vector.broadcast %cst_26 : f32 to vector<4x1xf32>
      %c0_27 = arith.constant 0 : index
      %c0_28 = arith.constant 0 : index
      %c0_29 = arith.constant 0 : index
      %38 = vector.load %arg5[%c0_27, %c0_28, %c0_29] : memref<1x4x1xf32, #tpu.memory_space<vmem>>, vector<1x4x1xf32>
      %39 = vector.shape_cast %38 : vector<1x4x1xf32> to vector<4x1xf32>
      %40 = vector.shape_cast %37 : vector<4x1xf32> to vector<1x4x1xf32>
      tpu.vector_store %arg5[%c0_27, %c0_28, %c0_29], %40 {strides = array<i32>} : memref<1x4x1xf32, #tpu.memory_space<vmem>>, vector<1x4x1xf32>,
    } else {
    }
    %c0_10 = arith.constant 0 : index
    %c0_11 = arith.constant 0 : index
    %c0_12 = arith.constant 0 : index
    %21 = vector.load %arg4[%c0_10, %c0_11, %c0_12] : memref<1x4x1xf32, #tpu.memory_space<vmem>>, vector<1x4x1xf32>
    %22 = vector.shape_cast %21 : vector<1x4x1xf32> to vector<4x1xf32>
    %23 = arith.addf %22, %13 : vector<4x1xf32>
    %c0_13 = arith.constant 0 : index
    %c0_14 = arith.constant 0 : index
    %c0_15 = arith.constant 0 : index
    %24 = vector.load %arg4[%c0_13, %c0_14, %c0_15] : memref<1x4x1xf32, #tpu.memory_space<vmem>>, vector<1x4x1xf32>
    %25 = vector.shape_cast %24 : vector<1x4x1xf32> to vector<4x1xf32>
    %26 = vector.shape_cast %23 : vector<4x1xf32> to vector<1x4x1xf32>
    tpu.vector_store %arg4[%c0_13, %c0_14, %c0_15], %26 {strides = array<i32>} : memref<1x4x1xf32, #tpu.memory_space<vmem>>, vector<1x4x1xf32>,
    %c0_16 = arith.constant 0 : index
    %c0_17 = arith.constant 0 : index
    %c0_18 = arith.constant 0 : index
    %27 = vector.load %arg5[%c0_16, %c0_17, %c0_18] : memref<1x4x1xf32, #tpu.memory_space<vmem>>, vector<1x4x1xf32>
    %28 = vector.shape_cast %27 : vector<1x4x1xf32> to vector<4x1xf32>
    %29 = arith.maximumf %28, %17 : vector<4x1xf32>
    %c0_19 = arith.constant 0 : index
    %c0_20 = arith.constant 0 : index
    %c0_21 = arith.constant 0 : index
    %30 = vector.load %arg5[%c0_19, %c0_20, %c0_21] : memref<1x4x1xf32, #tpu.memory_space<vmem>>, vector<1x4x1xf32>
    %31 = vector.shape_cast %30 : vector<1x4x1xf32> to vector<4x1xf32>
    %32 = vector.shape_cast %29 : vector<4x1xf32> to vector<1x4x1xf32>
    tpu.vector_store %arg5[%c0_19, %c0_20, %c0_21], %32 {strides = array<i32>} : memref<1x4x1xf32, #tpu.memory_space<vmem>>, vector<1x4x1xf32>,
    return
  }
  func.func @transform_0(%arg0: i32, %arg1: i32) -> (i32, i32, i32) {
    %c0_i32 = arith.constant 0 : i32
    %c0_i32_0 = arith.constant 0 : i32
    return %arg0, %c0_i32, %arg1 : i32, i32, i32
  }
  func.func @transform_1(%arg0: i32, %arg1: i32) -> (i32, i32) {
    %c0_i32 = arith.constant 0 : i32
    %c0_i32_0 = arith.constant 0 : i32
    %c0_i32_1 = arith.constant 0 : i32
    return %c0_i32, %c0_i32_0 : i32, i32
  }
  func.func @transform_2(%arg0: i32, %arg1: i32) -> (i32, i32, i32) {
    %c0_i32 = arith.constant 0 : i32
    %c0_i32_0 = arith.constant 0 : i32
    %c0_i32_1 = arith.constant 0 : i32
    return %arg0, %c0_i32, %c0_i32_0 : i32, i32, i32
  }
  func.func @transform_3(%arg0: i32, %arg1: i32) -> (i32, i32, i32) {
    %c0_i32 = arith.constant 0 : i32
    %c0_i32_0 = arith.constant 0 : i32
    %c0_i32_1 = arith.constant 0 : i32
    return %arg0, %c0_i32, %c0_i32_0 : i32, i32, i32
  }
}

module attributes {stable_mosaic.version = 11 : i64} {
  func.func @apply_kernel(%arg0: i32, %arg1: i32, %arg2: memref<1x4x1xf32, #tpu.memory_space<vmem>>, %arg3: memref<1x4x1xf32, #tpu.memory_space<vmem>>, %arg4: memref<4x1xf32, #tpu.memory_space<vmem>>, %arg5: memref<2x4xf32, #tpu.memory_space<vmem>>, %arg6: memref<2x1xf32, #tpu.memory_space<vmem>>, %arg7: memref<4x2xf32, #tpu.memory_space<vmem>>, %arg8: memref<4x1xf32, #tpu.memory_space<vmem>>, %arg9: memref<1x4x16xf32, #tpu.memory_space<vmem>>, %arg10: memref<1x4x16xf32, #tpu.memory_space<vmem>>, %arg11: memref<4x1xf32, #tpu.memory_space<vmem>>) attributes {dimension_semantics = [#tpu.dimension_semantics<parallel>, #tpu.dimension_semantics<arbitrary>], iteration_bounds = array<i64: 2, 1>, scalar_prefetch = 0 : i64, scratch_operands = 1 : i64, tpu.core_type = #tpu.core_type<tc>, window_params = [{transform_indices = @transform_0, window_bounds = array<i64: 1, 4, 1>}, {transform_indices = @transform_1, window_bounds = array<i64: 1, 4, 1>}, {pipeline_mode = #tpu.pipeline_mode<synchronous>, transform_indices = @transform_2, window_bounds = array<i64: 4, 1>}, {pipeline_mode = #tpu.pipeline_mode<synchronous>, transform_indices = @transform_3, window_bounds = array<i64: 2, 4>}, {pipeline_mode = #tpu.pipeline_mode<synchronous>, transform_indices = @transform_4, window_bounds = array<i64: 2, 1>}, {pipeline_mode = #tpu.pipeline_mode<synchronous>, transform_indices = @transform_5, window_bounds = array<i64: 4, 2>}, {pipeline_mode = #tpu.pipeline_mode<synchronous>, transform_indices = @transform_6, window_bounds = array<i64: 4, 1>}, {transform_indices = @transform_7, window_bounds = array<i64: 1, 4, 16>}, {transform_indices = @transform_8, window_bounds = array<i64: 1, 4, 16>}]} {
    %c0_i32 = arith.constant 0 : i32
    %0 = arith.cmpi eq, %arg1, %c0_i32 : i32
    %1 = arith.extui %0 : i1 to i32
    %c0_i32_0 = arith.constant 0 : i32
    %2 = arith.cmpi ne, %1, %c0_i32_0 : i32
    scf.if %2 {
      %c0_8 = arith.constant 0 : index
      %c0_9 = arith.constant 0 : index
      %c0_10 = arith.constant 0 : index
      %11 = vector.load %arg2[%c0_8, %c0_9, %c0_10] : memref<1x4x1xf32, #tpu.memory_space<vmem>>, vector<1x4x1xf32>
      %12 = vector.shape_cast %11 : vector<1x4x1xf32> to vector<4x1xf32>
      %cst = arith.constant 6.250000e-02 : f32
      %13 = vector.broadcast %cst : f32 to vector<4x1xf32>
      %14 = arith.mulf %12, %13 : vector<4x1xf32>
      %c0_11 = arith.constant 0 : index
      %c0_12 = arith.constant 0 : index
      %15 = vector.load %arg4[%c0_11, %c0_12] : memref<4x1xf32, #tpu.memory_space<vmem>>, vector<4x1xf32>
      %16 = arith.addf %14, %15 : vector<4x1xf32>
      %c0_13 = arith.constant 0 : index
      %c0_14 = arith.constant 0 : index
      %c0_15 = arith.constant 0 : index
      %17 = vector.load %arg3[%c0_13, %c0_14, %c0_15] : memref<1x4x1xf32, #tpu.memory_space<vmem>>, vector<1x4x1xf32>
      %18 = vector.shape_cast %17 : vector<1x4x1xf32> to vector<4x1xf32>
      %c0_16 = arith.constant 0 : index
      %c0_17 = arith.constant 0 : index
      %19 = vector.load %arg4[%c0_16, %c0_17] : memref<4x1xf32, #tpu.memory_space<vmem>>, vector<4x1xf32>
      %20 = arith.addf %18, %19 : vector<4x1xf32>
      %c0_18 = arith.constant 0 : index
      %c0_19 = arith.constant 0 : index
      %21 = vector.load %arg5[%c0_18, %c0_19] : memref<2x4xf32, #tpu.memory_space<vmem>>, vector<2x4xf32>
      %cst_20 = arith.constant dense<0.000000e+00> : vector<2x1xf32>
      %22 = tpu.matmul %21, %16, %cst_20 {dimension_numbers = #tpu.dot_dimension_numbers<[1], [0], [0], [1], [0, 0, 1, 1], [], []>} : vector<2x4xf32>, vector<4x1xf32>, vector<2x1xf32> -> vector<2x1xf32>
      %c0_21 = arith.constant 0 : index
      %c0_22 = arith.constant 0 : index
      %23 = vector.load %arg6[%c0_21, %c0_22] : memref<2x1xf32, #tpu.memory_space<vmem>>, vector<2x1xf32>
      %24 = arith.addf %22, %23 : vector<2x1xf32>
      %cst_23 = arith.constant 0.000000e+00 : f32
      %25 = vector.broadcast %cst_23 : f32 to vector<2x1xf32>
      %26 = arith.maximumf %24, %25 : vector<2x1xf32>
      %c0_24 = arith.constant 0 : index
      %c0_25 = arith.constant 0 : index
      %27 = vector.load %arg7[%c0_24, %c0_25] : memref<4x2xf32, #tpu.memory_space<vmem>>, vector<4x2xf32>
      %cst_26 = arith.constant dense<0.000000e+00> : vector<4x1xf32>
      %28 = tpu.matmul %27, %26, %cst_26 {dimension_numbers = #tpu.dot_dimension_numbers<[1], [0], [0], [1], [0, 0, 1, 1], [], []>} : vector<4x2xf32>, vector<2x1xf32>, vector<4x1xf32> -> vector<4x1xf32>
      %c0_27 = arith.constant 0 : index
      %c0_28 = arith.constant 0 : index
      %29 = vector.load %arg8[%c0_27, %c0_28] : memref<4x1xf32, #tpu.memory_space<vmem>>, vector<4x1xf32>
      %30 = arith.addf %28, %29 : vector<4x1xf32>
      %c0_29 = arith.constant 0 : index
      %c0_30 = arith.constant 0 : index
      %31 = vector.load %arg5[%c0_29, %c0_30] : memref<2x4xf32, #tpu.memory_space<vmem>>, vector<2x4xf32>
      %cst_31 = arith.constant dense<0.000000e+00> : vector<2x1xf32>
      %32 = tpu.matmul %31, %20, %cst_31 {dimension_numbers = #tpu.dot_dimension_numbers<[1], [0], [0], [1], [0, 0, 1, 1], [], []>} : vector<2x4xf32>, vector<4x1xf32>, vector<2x1xf32> -> vector<2x1xf32>
      %c0_32 = arith.constant 0 : index
      %c0_33 = arith.constant 0 : index
      %33 = vector.load %arg6[%c0_32, %c0_33] : memref<2x1xf32, #tpu.memory_space<vmem>>, vector<2x1xf32>
      %34 = arith.addf %32, %33 : vector<2x1xf32>
      %cst_34 = arith.constant 0.000000e+00 : f32
      %35 = vector.broadcast %cst_34 : f32 to vector<2x1xf32>
      %36 = arith.maximumf %34, %35 : vector<2x1xf32>
      %c0_35 = arith.constant 0 : index
      %c0_36 = arith.constant 0 : index
      %37 = vector.load %arg7[%c0_35, %c0_36] : memref<4x2xf32, #tpu.memory_space<vmem>>, vector<4x2xf32>
      %cst_37 = arith.constant dense<0.000000e+00> : vector<4x1xf32>
      %38 = tpu.matmul %37, %36, %cst_37 {dimension_numbers = #tpu.dot_dimension_numbers<[1], [0], [0], [1], [0, 0, 1, 1], [], []>} : vector<4x2xf32>, vector<2x1xf32>, vector<4x1xf32> -> vector<4x1xf32>
      %c0_38 = arith.constant 0 : index
      %c0_39 = arith.constant 0 : index
      %39 = vector.load %arg8[%c0_38, %c0_39] : memref<4x1xf32, #tpu.memory_space<vmem>>, vector<4x1xf32>
      %40 = arith.addf %38, %39 : vector<4x1xf32>
      %41 = arith.addf %30, %40 : vector<4x1xf32>
      %42 = arith.negf %41 : vector<4x1xf32>
      %43 = math.exp %42 : vector<4x1xf32>
      %cst_40 = arith.constant 1.000000e+00 : f32
      %44 = vector.broadcast %cst_40 : f32 to vector<4x1xf32>
      %45 = arith.addf %44, %43 : vector<4x1xf32>
      %46 = arith.divf %44, %45 : vector<4x1xf32>
      %c0_41 = arith.constant 0 : index
      %c0_42 = arith.constant 0 : index
      %47 = vector.load %arg11[%c0_41, %c0_42] : memref<4x1xf32, #tpu.memory_space<vmem>>, vector<4x1xf32>
      tpu.vector_store %arg11[%c0_41, %c0_42], %46 {strides = array<i32>} : memref<4x1xf32, #tpu.memory_space<vmem>>, vector<4x1xf32>,
    } else {
    }
    %c0 = arith.constant 0 : index
    %c0_1 = arith.constant 0 : index
    %c0_2 = arith.constant 0 : index
    %3 = vector.load %arg9[%c0, %c0_1, %c0_2] : memref<1x4x16xf32, #tpu.memory_space<vmem>>, vector<1x4x16xf32>
    %4 = vector.shape_cast %3 : vector<1x4x16xf32> to vector<4x16xf32>
    %c0_3 = arith.constant 0 : index
    %c0_4 = arith.constant 0 : index
    %5 = vector.load %arg11[%c0_3, %c0_4] : memref<4x1xf32, #tpu.memory_space<vmem>>, vector<4x1xf32>
    %6 = vector.broadcast %5 : vector<4x1xf32> to vector<4x16xf32>
    %7 = arith.addf %4, %6 : vector<4x16xf32>
    %c0_5 = arith.constant 0 : index
    %c0_6 = arith.constant 0 : index
    %c0_7 = arith.constant 0 : index
    %8 = vector.load %arg10[%c0_5, %c0_6, %c0_7] : memref<1x4x16xf32, #tpu.memory_space<vmem>>, vector<1x4x16xf32>
    %9 = vector.shape_cast %8 : vector<1x4x16xf32> to vector<4x16xf32>
    %10 = vector.shape_cast %7 : vector<4x16xf32> to vector<1x4x16xf32>
    tpu.vector_store %arg10[%c0_5, %c0_6, %c0_7], %10 {strides = array<i32>} : memref<1x4x16xf32, #tpu.memory_space<vmem>>, vector<1x4x16xf32>,
    return
  }
  func.func @transform_0(%arg0: i32, %arg1: i32) -> (i32, i32, i32) {
    %c0_i32 = arith.constant 0 : i32
    %c0_i32_0 = arith.constant 0 : i32
    %c0_i32_1 = arith.constant 0 : i32
    return %arg0, %c0_i32, %c0_i32_0 : i32, i32, i32
  }
  func.func @transform_1(%arg0: i32, %arg1: i32) -> (i32, i32, i32) {
    %c0_i32 = arith.constant 0 : i32
    %c0_i32_0 = arith.constant 0 : i32
    %c0_i32_1 = arith.constant 0 : i32
    return %arg0, %c0_i32, %c0_i32_0 : i32, i32, i32
  }
  func.func @transform_2(%arg0: i32, %arg1: i32) -> (i32, i32) {
    %c0_i32 = arith.constant 0 : i32
    %c0_i32_0 = arith.constant 0 : i32
    %c0_i32_1 = arith.constant 0 : i32
    return %c0_i32, %c0_i32_0 : i32, i32
  }
  func.func @transform_3(%arg0: i32, %arg1: i32) -> (i32, i32) {
    %c0_i32 = arith.constant 0 : i32
    %c0_i32_0 = arith.constant 0 : i32
    %c0_i32_1 = arith.constant 0 : i32
    return %c0_i32, %c0_i32_0 : i32, i32
  }
  func.func @transform_4(%arg0: i32, %arg1: i32) -> (i32, i32) {
    %c0_i32 = arith.constant 0 : i32
    %c0_i32_0 = arith.constant 0 : i32
    %c0_i32_1 = arith.constant 0 : i32
    return %c0_i32, %c0_i32_0 : i32, i32
  }
  func.func @transform_5(%arg0: i32, %arg1: i32) -> (i32, i32) {
    %c0_i32 = arith.constant 0 : i32
    %c0_i32_0 = arith.constant 0 : i32
    %c0_i32_1 = arith.constant 0 : i32
    return %c0_i32, %c0_i32_0 : i32, i32
  }
  func.func @transform_6(%arg0: i32, %arg1: i32) -> (i32, i32) {
    %c0_i32 = arith.constant 0 : i32
    %c0_i32_0 = arith.constant 0 : i32
    %c0_i32_1 = arith.constant 0 : i32
    return %c0_i32, %c0_i32_0 : i32, i32
  }
  func.func @transform_7(%arg0: i32, %arg1: i32) -> (i32, i32, i32) {
    %c0_i32 = arith.constant 0 : i32
    %c0_i32_0 = arith.constant 0 : i32
    return %arg0, %c0_i32, %arg1 : i32, i32, i32
  }
  func.func @transform_8(%arg0: i32, %arg1: i32) -> (i32, i32, i32) {
    %c0_i32 = arith.constant 0 : i32
    %c0_i32_0 = arith.constant 0 : i32
    return %arg0, %c0_i32, %arg1 : i32, i32, i32
  }
}

</mosaic_0001>

<llo_original>
// kernel: loab_forward.2
$region0: #{loab_forward.2}
  #allocation0 [shape = 'u32[]', space=smem, size = 0x4, offset = 0x4, fixed_abs, tag = 'smem constant byte address 0x4 - core index']
  #allocation1 [shape = 'u32[72,128]{1,0:T(1,128)}', space=vmem, size = 0x9000, scoped, tag = 'internal scratch']
  %s0 = inlined_call_operand.vmem [shape: f32[2,4,16], index: 0, kind: input, shape index: {}]
  %s1 = inlined_call_operand.vmem [shape: bf16[4,4], index: 1, kind: input, shape index: {}]
  %s2 = inlined_call_operand.vmem [shape: f32[2,4,1], index: 2, kind: output, shape index: {0}]
  %s3 = inlined_call_operand.vmem [shape: f32[2,4,1], index: 3, kind: output, shape index: {1}]
  %4 = xla_tuple %s2, %s3
  %s5 = sld [smem:[#allocation0]]
  $region53: #{loab_forward.2} parent=0
    _
  %s7 = ssub.s32 1, %s5
  %s8 = scalar_select 0, %s7, %s5
  loop: start=0, step=1, limit=4
  $region2: #{loab_forward.2} parent=0 // loop_pre_header
    _
  $region3: #{loab_forward.2} parent=0 // loop_header
    %s10 = sphi 0, %s14
    %p11 = scmp.ge.s32.totalorder %s10, 4
    %s17 = sphi 0, %s29
    %s18 = sphi 0, %s25
    %s19 = sphi 0, %s17
    %s20 = sphi 0, %s18
    %s21 = sphi 0, %s19
    %s22 = sphi 0, %s20
    %s34 = sphi 0, %s36
    %s37 = sphi 0, %s34
    %s38 = sphi 0, %s37
    %s54 = sphi 0, %s38
    %s58 = sphi 0, %s58
    %s60 = sphi 0, %s58
    %s61 = sphi 0, %s60
    %s75 = sphi 0, %s61
    %s81 = sphi 0, %s83
    %s84 = sphi 0, %s81
    %s85 = sphi 0, %s84
    %s101 = sphi 0, %s85
    %s107 = sphi 0, %s109
    %s110 = sphi 0, %s107
    %s111 = sphi 0, %s110
    %s127 = sphi 0, %s111
  $region4: #{loab_forward.2} parent=0 // loop_header_branch
    %13 = sbr.rel (%p11) target = $region8
  $region5: #{loab_forward.2} parent=0 // loop_body
    %s15 = ssub.s32 %s10, 1
    %s16 = ssub.s32 %s10, 2
    %s23 = sadd.s32 1, %s18
    %p24 = scmp.ge.s32.totalorder %s23, 1
    %s25 = scalar_select %p24, 0, %s23
    %s26 = sadd.s32 1, %s17
    %s27 = scalar_select %p24, %s26, %s17
    %p28 = scmp.ge.s32.totalorder %s27, 2
    %s29 = scalar_select %p28, 0, %s27
    %s30 = ssub.s32 %s17, %s29
    %s31 = ssub.s32 %s18, %s25
    %s32 = sor.u32 %s30, %s31
    %p33 = scmp.eq.s32.totalorder %s32, 0
    %s35 = sadd.s32 %s34, 1
    %s36 = scalar_select %p33, %s34, %s35
    %p39 = pneg %p33
    %p40 = scmp.eq.s32.totalorder %s10, 1
    %p41 = por %p39, %p40
    %p42 = scmp.ne.s32.totalorder %s34, %s37
    %p43 = scmp.eq.s32.totalorder %s10, 0
    %p44 = por %p42, %p43
    %p45 = scmp.ne.s32.totalorder %s34, %s37
    %p46 = scmp.eq.s32.totalorder %s15, 1
    %p47 = por %p45, %p46
    %p48 = scmp.ne.s32.totalorder %s37, %s38
    %p49 = scmp.eq.s32.totalorder %s15, 0
    %p50 = por %p48, %p49
    %p51 = scmp.ne.s32.totalorder %s37, %s38
    %p52 = scmp.eq.s32.totalorder %s16, 1
    %p53 = por %p51, %p52
    %p55 = scmp.ne.s32.totalorder %s38, %s54
    %p56 = scmp.eq.s32.totalorder %s16, 0
    %p57 = por %p55, %p56
    %s59 = sadd.s32 %s58, 1
    %p62 = scmp.eq.s32.totalorder %s10, 1
    %p63 = scmp.ne.s32.totalorder %s58, %s60
    %p64 = scmp.eq.s32.totalorder %s10, 0
    %p65 = por %p63, %p64
    %p66 = scmp.ne.s32.totalorder %s58, %s60
    %p67 = scmp.eq.s32.totalorder %s15, 1
    %p68 = por %p66, %p67
    %p69 = scmp.ne.s32.totalorder %s60, %s61
    %p70 = scmp.eq.s32.totalorder %s15, 0
    %p71 = por %p69, %p70
    %p72 = scmp.ne.s32.totalorder %s60, %s61
    %p73 = scmp.eq.s32.totalorder %s16, 1
    %p74 = por %p72, %p73
    %p76 = scmp.ne.s32.totalorder %s61, %s75
    %p77 = scmp.eq.s32.totalorder %s16, 0
    %p78 = por %p76, %p77
    %s79 = ssub.s32 %s17, %s29
    %p80 = scmp.eq.s32.totalorder %s79, 0
    %s82 = sadd.s32 %s81, 1
    %s83 = scalar_select %p80, %s81, %s82
    %p86 = pneg %p80
    %p87 = scmp.eq.s32.totalorder %s10, 1
    %p88 = por %p86, %p87
    %p89 = scmp.ne.s32.totalorder %s81, %s84
    %p90 = scmp.eq.s32.totalorder %s10, 0
    %p91 = por %p89, %p90
    %p92 = scmp.ne.s32.totalorder %s81, %s84
    %p93 = scmp.eq.s32.totalorder %s15, 1
    %p94 = por %p92, %p93
    %p95 = scmp.ne.s32.totalorder %s84, %s85
    %p96 = scmp.eq.s32.totalorder %s15, 0
    %p97 = por %p95, %p96
    %p98 = scmp.ne.s32.totalorder %s84, %s85
    %p99 = scmp.eq.s32.totalorder %s16, 1
    %p100 = por %p98, %p99
    %p102 = scmp.ne.s32.totalorder %s85, %s101
    %p103 = scmp.eq.s32.totalorder %s16, 0
    %p104 = por %p102, %p103
    %s105 = ssub.s32 %s17, %s29
    %p106 = scmp.eq.s32.totalorder %s105, 0
    %s108 = sadd.s32 %s107, 1
    %s109 = scalar_select %p106, %s107, %s108
    %p112 = pneg %p106
    %p113 = scmp.eq.s32.totalorder %s10, 1
    %p114 = por %p112, %p113
    %p115 = scmp.ne.s32.totalorder %s107, %s110
    %p116 = scmp.eq.s32.totalorder %s10, 0
    %p117 = por %p115, %p116
    %p118 = scmp.ne.s32.totalorder %s107, %s110
    %p119 = scmp.eq.s32.totalorder %s15, 1
    %p120 = por %p118, %p119
    %p121 = scmp.ne.s32.totalorder %s110, %s111
    %p122 = scmp.eq.s32.totalorder %s15, 0
    %p123 = por %p121, %p122
    %p124 = scmp.ne.s32.totalorder %s110, %s111
    %p125 = scmp.eq.s32.totalorder %s16, 1
    %p126 = por %p124, %p125
    %p128 = scmp.ne.s32.totalorder %s111, %s127
    %p129 = scmp.eq.s32.totalorder %s16, 0
    %p130 = por %p128, %p129
    %p131 = scmp.le.s32.totalorder 1, %s10
    %p132 = scmp.lt.s32.totalorder %s10, 3
    %p133 = pnand %p131, %p132
    %p134 = pneg %p133
    // Predicated region
    $region9: #{loab_forward.2} parent=5 // pred_check
      _
    $region10: #{loab_forward.2} parent=5 // pred_check_branch
      %136 = sbr.rel (%p133) target = $region12
    $region11: #{loab_forward.2} parent=5 // pred_region
      %s137 = ssub.s32 %s10, 1
      // Predicated region
      $region13: #{loab_forward.2} parent=11 // pred_check
        %p138 = pneg %p71
      $region14: #{loab_forward.2} parent=11 // pred_check_branch
        %140 = sbr.rel (%p138) target = $region16
      $region15: #{loab_forward.2} parent=11 // pred_region
        _
      $region16: #{loab_forward.2} parent=11 // pred_fallthru
        _
    $region12: #{loab_forward.2} parent=5 // pred_fallthru
      _
    %p141 = scmp.lt.s32.totalorder %s10, 2
    // Predicated region
    $region17: #{loab_forward.2} parent=5 // pred_check
      %p142 = pneg %p141
    $region18: #{loab_forward.2} parent=5 // pred_check_branch
      %144 = sbr.rel (%p142) target = $region20
    $region19: #{loab_forward.2} parent=5 // pred_region
      // Predicated region
      $region21: #{loab_forward.2} parent=19 // pred_check
        %p145 = pneg %p44
      $region22: #{loab_forward.2} parent=19 // pred_check_branch
        %147 = sbr.rel (%p145) target = $region24
      $region23: #{loab_forward.2} parent=19 // pred_region
        %p148 = scmp.lt.s32.totalorder %s17, 1
        %s149 = scalar_select %p148, %s17, 1
        %p150 = scmp.lt.s32.totalorder %s18, 0
        %s151 = scalar_select %p150, %s18, 0
        %s152 = sadd.s32 %s151, %s149
        %s153 = smul.addr %s152, 4
        %s154 = scalar_lea.vmem %s0, %s153
      $region24: #{loab_forward.2} parent=19 // pred_fallthru
        _
    $region20: #{loab_forward.2} parent=5 // pred_fallthru
      _
    %p155 = scmp.le.s32.totalorder 1, %s10
    %p156 = scmp.lt.s32.totalorder %s10, 3
    %p157 = pnand %p155, %p156
    %p158 = pneg %p157
    // Predicated region
    $region25: #{loab_forward.2} parent=5 // pred_check
      _
    $region26: #{loab_forward.2} parent=5 // pred_check_branch
      %160 = sbr.rel (%p157) target = $region28
    $region27: #{loab_forward.2} parent=5 // pred_region
      %s161 = ssub.s32 %s10, 1
      %p162 = scmp.lt.s32.totalorder %s19, 1
      %s163 = scalar_select %p162, %s19, 1
      %p164 = scmp.lt.s32.totalorder %s20, 0
      %s165 = scalar_select %p164, %s20, 0
      %s166 = sadd.s32 %s165, %s163
      %s167 = smul.addr %s166, 4
      %s168 = scalar_lea.vmem %s0, %s167
      %p169 = pneg %p50
      %p170 = pneg %p47
      %p171 = pneg %p71
      %p172 = pneg %p68
      %p173 = pneg %p97
      %p174 = pneg %p94
      %p175 = scmp.lt.s32.totalorder %s19, 1
      %s176 = scalar_select %p175, %s19, 1
      %s177 = smul.addr %s176, 4
      %s178 = scalar_lea.vmem %s2, %s177
      %p179 = pneg %p123
      %p180 = pneg %p120
      %p181 = scmp.lt.s32.totalorder %s19, 1
      %s182 = scalar_select %p181, %s19, 1
      %s183 = smul.addr %s182, 4
      %s184 = scalar_lea.vmem %s3, %s183
      %p185 = scmp.lt.s32.totalorder %s19, 1
      %s186 = scalar_select %p185, %s19, 1
      %p187 = scmp.lt.s32.totalorder %s20, 0
      %s188 = scalar_select %p187, %s20, 0
      %s189 = sadd.s32 %s188, %s186
      %s190 = smul.addr %s189, 4
      %s191 = scalar_lea.vmem %s0, %s190
      %p192 = scmp.lt.s32.totalorder %s19, 1
      %s193 = scalar_select %p192, %s19, 1
      %s194 = smul.addr %s193, 4
      %s195 = scalar_lea.vmem %s2, %s194
      %p196 = scmp.lt.s32.totalorder %s19, 1
      %s197 = scalar_select %p196, %s19, 1
      %s198 = smul.addr %s197, 4
      %s199 = scalar_lea.vmem %s3, %s198
      %v201 = vld [vmem:[%s191] sm:$0xf]
      %v202 = vpack.c.bf16 %v201, %v201
      %v203 = vld [vmem:[%s1] sm:$0x3]
      %vm204 = vcmask 31744
      %v206 = vsel %vm204, %v203, 0
      %vm208 = vcmask 1041408
      %v210 = vsel %vm208, %v202, 0
      %212 = vmatpush.bf16.msra.mxu0 0
      %213 = vmatpush.bf16.msra.mxu0 0
      %214 = vmatpush.bf16.msra.mxu0 0
      %215 = vmatpush.bf16.msra.mxu0 0
      %216 = vmatpush.bf16.msra.mxu0 0
      %217 = vmatpush.bf16.msra.mxu0 0
      %218 = vmatpush.bf16.msra.mxu0 0
      %219 = vmatpush.bf16.msra.mxu0 %v210
      %220 = vmatmul.bf16.gmra.mxu0 %v206
      %v221 = vpop.f32.mrf.mxu0
      %v222 = vadd.f32 0.0, %v221
      %v223 = vpop.f32.mrf.mxu0
      %224 = vdwg.mxu0
      %v225 = vlaneseq
      %v226 = vand.u32 %v225, 127
      %s227 = smul.u32 %s20, 16
      %s228 = ssub.s32 16, %s227
      %v229 = vstv %s228
      %vm230 = vcmp.lt.s32.totalorder %v226, %v229
      %v231 = vsel %vm230, %v222, 0.0
      %vm232 = vcmask 125952
      %v233 = vsel %vm232, %v231, 0.0
      %234 = vadd.xlane.f32.xlu0 %v233
      %v235 = vpop.xlane.xlu0 %234
      %v236 = vsel %vm230, %v222, -inf
      %v237 = vsel %vm232, %v236, -inf
      %238 = vmax.xlane.f32.xlu0 %v237
      %v239 = vpop.xlane.xlu0 %238
      %p240 = scmp.eq.s32.totalorder %s20, 0
      // Predicated region
      $region29: #{loab_forward.2} parent=27 // pred_check
        %p241 = pneg %p240
      $region30: #{loab_forward.2} parent=27 // pred_check_branch
        %243 = sbr.rel (%p241) target = $region32
      $region31: #{loab_forward.2} parent=27 // pred_region
        %vm244 = vcmask 3072
        %245 = vst.msk [vmem:[%s195] sm:$0xf] %vm244, 0.0
        %246 = vst.msk [vmem:[%s199] sm:$0xf] %vm244, -inf
      $region32: #{loab_forward.2} parent=27 // pred_fallthru
        _
      %v247 = vld [vmem:[%s195] sm:$0xf]
      %v248 = vadd.f32 %v247, %v235
      %vm249 = vcmask 3072
      %250 = vst.msk [vmem:[%s195] sm:$0xf] %vm249, %v248
      %v251 = vld [vmem:[%s199] sm:$0xf]
      %v252 = vmax.f32 %v251, %v239
      %253 = vst.msk [vmem:[%s199] sm:$0xf] %vm249, %v252
      %p254 = scmp.lt.s32.totalorder %s19, 1
      %s255 = scalar_select %p254, %s19, 1
      %s256 = smul.addr %s255, 4
      %s257 = scalar_lea.vmem %s2, %s256
      %p258 = scmp.lt.s32.totalorder %s19, 1
      %s259 = scalar_select %p258, %s19, 1
      %s260 = smul.addr %s259, 4
      %s261 = scalar_lea.vmem %s3, %s260
      // Predicated region
      $region33: #{loab_forward.2} parent=27 // pred_check
        %p262 = pneg %p94
      $region34: #{loab_forward.2} parent=27 // pred_check_branch
        %264 = sbr.rel (%p262) target = $region36
      $region35: #{loab_forward.2} parent=27 // pred_region
        _
      $region36: #{loab_forward.2} parent=27 // pred_fallthru
        _
      // Predicated region
      $region37: #{loab_forward.2} parent=27 // pred_check
        %p265 = pneg %p120
      $region38: #{loab_forward.2} parent=27 // pred_check_branch
        %267 = sbr.rel (%p265) target = $region40
      $region39: #{loab_forward.2} parent=27 // pred_region
        _
      $region40: #{loab_forward.2} parent=27 // pred_fallthru
        _
    $region28: #{loab_forward.2} parent=5 // pred_fallthru
      _
    %p268 = scmp.le.s32.totalorder 2, %s10
    // Predicated region
    $region41: #{loab_forward.2} parent=5 // pred_check
      %p269 = pneg %p268
    $region42: #{loab_forward.2} parent=5 // pred_check_branch
      %271 = sbr.rel (%p269) target = $region44
    $region43: #{loab_forward.2} parent=5 // pred_region
      %s272 = ssub.s32 %s10, 2
      // Predicated region
      $region45: #{loab_forward.2} parent=43 // pred_check
        %p273 = pneg %p100
      $region46: #{loab_forward.2} parent=43 // pred_check_branch
        %275 = sbr.rel (%p273) target = $region48
      $region47: #{loab_forward.2} parent=43 // pred_region
        %p276 = scmp.lt.s32.totalorder %s21, 1
        %s277 = scalar_select %p276, %s21, 1
        %s278 = smul.addr %s277, 4
        %s279 = scalar_lea.vmem %s2, %s278
      $region48: #{loab_forward.2} parent=43 // pred_fallthru
        _
      // Predicated region
      $region49: #{loab_forward.2} parent=43 // pred_check
        %p280 = pneg %p126
      $region50: #{loab_forward.2} parent=43 // pred_check_branch
        %282 = sbr.rel (%p280) target = $region52
      $region51: #{loab_forward.2} parent=43 // pred_region
        %p283 = scmp.lt.s32.totalorder %s21, 1
        %s284 = scalar_select %p283, %s21, 1
        %s285 = smul.addr %s284, 4
        %s286 = scalar_lea.vmem %s3, %s285
      $region52: #{loab_forward.2} parent=43 // pred_fallthru
        _
    $region44: #{loab_forward.2} parent=5 // pred_fallthru
      _
  $region6: #{loab_forward.2} parent=0 // loop_footer
    %s14 = sadd.s32 1, %s10
  $region7: #{loab_forward.2} parent=0 // loop_footer_branch
    %9 = sbr.rel target = $region3
  $region8: #{loab_forward.2} parent=0 // loop_exit
    _

// kernel: loab_forward.3
$region0: #{loab_forward.3}
  #allocation0 [shape = 'u32[]', space=smem, size = 0x4, offset = 0x4, fixed_abs, tag = 'smem constant byte address 0x4 - core index']
  #allocation1 [shape = 'u32[72,128]{1,0:T(1,128)}', space=vmem, size = 0x9000, scoped, tag = 'internal scratch']
  #allocation2 [shape = 'f32[4,1]{1,0:T(4,128)}', space=vmem, size = 0x800, scoped, tag = 'scratch operand']
  %s0 = inlined_call_operand.vmem [shape: f32[2,4,1], index: 0, kind: input, shape index: {}]
  %s1 = inlined_call_operand.vmem [shape: f32[2,4,1], index: 1, kind: input, shape index: {}]
  %s2 = inlined_call_operand.vmem [shape: f32[4,1], index: 2, kind: input, shape index: {}]
  %s3 = inlined_call_operand.vmem [shape: f32[2,4], index: 3, kind: input, shape index: {}]
  %s4 = inlined_call_operand.vmem [shape: f32[2,1], index: 4, kind: input, shape index: {}]
  %s5 = inlined_call_operand.vmem [shape: f32[4,2], index: 5, kind: input, shape index: {}]
  %s6 = inlined_call_operand.vmem [shape: f32[4,1], index: 6, kind: input, shape index: {}]
  %s7 = inlined_call_operand.vmem [shape: f32[2,4,16], index: 7, kind: input, shape index: {}]
  %s8 = inlined_call_operand.hbm [shape: f32[2,4,16], index: 8, kind: output, shape index: {}]
  %s9 = sld [smem:[#allocation0]]
  $region69: #{loab_forward.3} parent=0
    _
  %s11 = ssub.s32 1, %s9
  %s12 = scalar_select 0, %s11, %s9
  $region1: #{loab_forward.3} parent=0
    #allocation3 [shape = 'u8[4096]{0}', space=vmem, size = 0x1000, scoped, tag = 'output window, operand 0']
    #allocation4 [shape = 's32[2]{0}', space=sflag, size = 0x8, scoped, tag = 'scoped memory for loab_forward.3']
    %13 = vsyncpa [#allocation4], 0
    %s14 = scalar_lea.sflag [#allocation4], 1
    %15 = vsyncpa %s14, 0
    loop: start=0, step=1, limit=4
    $region2: #{loab_forward.3} parent=1 // loop_pre_header
      _
    $region3: #{loab_forward.3} parent=1 // loop_header
      %s17 = sphi 0, %s21
      %p18 = scmp.ge.s32.totalorder %s17, 4
      %s24 = sphi 0, %s36
      %s25 = sphi 0, %s32
      %s26 = sphi 0, %s24
      %s27 = sphi 0, %s25
      %s28 = sphi 0, %s26
      %s29 = sphi 0, %s27
      %s39 = sphi 0, %s41
      %s42 = sphi 0, %s39
      %s43 = sphi 0, %s42
      %s59 = sphi 0, %s43
      %s65 = sphi 0, %s67
      %s68 = sphi 0, %s65
      %s69 = sphi 0, %s68
      %s85 = sphi 0, %s69
      %s89 = sphi 0, %s89
      %s91 = sphi 0, %s89
      %s92 = sphi 0, %s91
      %s106 = sphi 0, %s92
      %s110 = sphi 0, %s110
      %s112 = sphi 0, %s110
      %s113 = sphi 0, %s112
      %s127 = sphi 0, %s113
      %s131 = sphi 0, %s131
      %s133 = sphi 0, %s131
      %s134 = sphi 0, %s133
      %s148 = sphi 0, %s134
      %s152 = sphi 0, %s152
      %s154 = sphi 0, %s152
      %s155 = sphi 0, %s154
      %s169 = sphi 0, %s155
      %s173 = sphi 0, %s173
      %s175 = sphi 0, %s173
      %s176 = sphi 0, %s175
      %s190 = sphi 0, %s176
      %s198 = sphi 0, %s200
      %s201 = sphi 0, %s198
      %s202 = sphi 0, %s201
      %s218 = sphi 0, %s202
      %s226 = sphi 0, %s228
      %s229 = sphi 0, %s226
      %s230 = sphi 0, %s229
      %s246 = sphi 0, %s230
    $region4: #{loab_forward.3} parent=1 // loop_header_branch
      %20 = sbr.rel (%p18) target = $region8
    $region5: #{loab_forward.3} parent=1 // loop_body
      %s22 = ssub.s32 %s17, 1
      %s23 = ssub.s32 %s17, 2
      %s30 = sadd.s32 1, %s25
      %p31 = scmp.ge.s32.totalorder %s30, 1
      %s32 = scalar_select %p31, 0, %s30
      %s33 = sadd.s32 1, %s24
      %s34 = scalar_select %p31, %s33, %s24
      %p35 = scmp.ge.s32.totalorder %s34, 2
      %s36 = scalar_select %p35, 0, %s34
      %s37 = ssub.s32 %s24, %s36
      %p38 = scmp.eq.s32.totalorder %s37, 0
      %s40 = sadd.s32 %s39, 1
      %s41 = scalar_select %p38, %s39, %s40
      %p44 = pneg %p38
      %p45 = scmp.eq.s32.totalorder %s17, 1
      %p46 = por %p44, %p45
      %p47 = scmp.ne.s32.totalorder %s39, %s42
      %p48 = scmp.eq.s32.totalorder %s17, 0
      %p49 = por %p47, %p48
      %p50 = scmp.ne.s32.totalorder %s39, %s42
      %p51 = scmp.eq.s32.totalorder %s22, 1
      %p52 = por %p50, %p51
      %p53 = scmp.ne.s32.totalorder %s42, %s43
      %p54 = scmp.eq.s32.totalorder %s22, 0
      %p55 = por %p53, %p54
      %p56 = scmp.ne.s32.totalorder %s42, %s43
      %p57 = scmp.eq.s32.totalorder %s23, 1
      %p58 = por %p56, %p57
      %p60 = scmp.ne.s32.totalorder %s43, %s59
      %p61 = scmp.eq.s32.totalorder %s23, 0
      %p62 = por %p60, %p61
      %s63 = ssub.s32 %s24, %s36
      %p64 = scmp.eq.s32.totalorder %s63, 0
      %s66 = sadd.s32 %s65, 1
      %s67 = scalar_select %p64, %s65, %s66
      %p70 = pneg %p64
      %p71 = scmp.eq.s32.totalorder %s17, 1
      %p72 = por %p70, %p71
      %p73 = scmp.ne.s32.totalorder %s65, %s68
      %p74 = scmp.eq.s32.totalorder %s17, 0
      %p75 = por %p73, %p74
      %p76 = scmp.ne.s32.totalorder %s65, %s68
      %p77 = scmp.eq.s32.totalorder %s22, 1
      %p78 = por %p76, %p77
      %p79 = scmp.ne.s32.totalorder %s68, %s69
      %p80 = scmp.eq.s32.totalorder %s22, 0
      %p81 = por %p79, %p80
      %p82 = scmp.ne.s32.totalorder %s68, %s69
      %p83 = scmp.eq.s32.totalorder %s23, 1
      %p84 = por %p82, %p83
      %p86 = scmp.ne.s32.totalorder %s69, %s85
      %p87 = scmp.eq.s32.totalorder %s23, 0
      %p88 = por %p86, %p87
      %s90 = sadd.s32 %s89, 1
      %p93 = scmp.eq.s32.totalorder %s17, 1
      %p94 = scmp.ne.s32.totalorder %s89, %s91
      %p95 = scmp.eq.s32.totalorder %s17, 0
      %p96 = por %p94, %p95
      %p97 = scmp.ne.s32.totalorder %s89, %s91
      %p98 = scmp.eq.s32.totalorder %s22, 1
      %p99 = por %p97, %p98
      %p100 = scmp.ne.s32.totalorder %s91, %s92
      %p101 = scmp.eq.s32.totalorder %s22, 0
      %p102 = por %p100, %p101
      %p103 = scmp.ne.s32.totalorder %s91, %s92
      %p104 = scmp.eq.s32.totalorder %s23, 1
      %p105 = por %p103, %p104
      %p107 = scmp.ne.s32.totalorder %s92, %s106
      %p108 = scmp.eq.s32.totalorder %s23, 0
      %p109 = por %p107, %p108
      %s111 = sadd.s32 %s110, 1
      %p114 = scmp.eq.s32.totalorder %s17, 1
      %p115 = scmp.ne.s32.totalorder %s110, %s112
      %p116 = scmp.eq.s32.totalorder %s17, 0
      %p117 = por %p115, %p116
      %p118 = scmp.ne.s32.totalorder %s110, %s112
      %p119 = scmp.eq.s32.totalorder %s22, 1
      %p120 = por %p118, %p119
      %p121 = scmp.ne.s32.totalorder %s112, %s113
      %p122 = scmp.eq.s32.totalorder %s22, 0
      %p123 = por %p121, %p122
      %p124 = scmp.ne.s32.totalorder %s112, %s113
      %p125 = scmp.eq.s32.totalorder %s23, 1
      %p126 = por %p124, %p125
      %p128 = scmp.ne.s32.totalorder %s113, %s127
      %p129 = scmp.eq.s32.totalorder %s23, 0
      %p130 = por %p128, %p129
      %s132 = sadd.s32 %s131, 1
      %p135 = scmp.eq.s32.totalorder %s17, 1
      %p136 = scmp.ne.s32.totalorder %s131, %s133
      %p137 = scmp.eq.s32.totalorder %s17, 0
      %p138 = por %p136, %p137
      %p139 = scmp.ne.s32.totalorder %s131, %s133
      %p140 = scmp.eq.s32.totalorder %s22, 1
      %p141 = por %p139, %p140
      %p142 = scmp.ne.s32.totalorder %s133, %s134
      %p143 = scmp.eq.s32.totalorder %s22, 0
      %p144 = por %p142, %p143
      %p145 = scmp.ne.s32.totalorder %s133, %s134
      %p146 = scmp.eq.s32.totalorder %s23, 1
      %p147 = por %p145, %p146
      %p149 = scmp.ne.s32.totalorder %s134, %s148
      %p150 = scmp.eq.s32.totalorder %s23, 0
      %p151 = por %p149, %p150
      %s153 = sadd.s32 %s152, 1
      %p156 = scmp.eq.s32.totalorder %s17, 1
      %p157 = scmp.ne.s32.totalorder %s152, %s154
      %p158 = scmp.eq.s32.totalorder %s17, 0
      %p159 = por %p157, %p158
      %p160 = scmp.ne.s32.totalorder %s152, %s154
      %p161 = scmp.eq.s32.totalorder %s22, 1
      %p162 = por %p160, %p161
      %p163 = scmp.ne.s32.totalorder %s154, %s155
      %p164 = scmp.eq.s32.totalorder %s22, 0
      %p165 = por %p163, %p164
      %p166 = scmp.ne.s32.totalorder %s154, %s155
      %p167 = scmp.eq.s32.totalorder %s23, 1
      %p168 = por %p166, %p167
      %p170 = scmp.ne.s32.totalorder %s155, %s169
      %p171 = scmp.eq.s32.totalorder %s23, 0
      %p172 = por %p170, %p171
      %s174 = sadd.s32 %s173, 1
      %p177 = scmp.eq.s32.totalorder %s17, 1
      %p178 = scmp.ne.s32.totalorder %s173, %s175
      %p179 = scmp.eq.s32.totalorder %s17, 0
      %p180 = por %p178, %p179
      %p181 = scmp.ne.s32.totalorder %s173, %s175
      %p182 = scmp.eq.s32.totalorder %s22, 1
      %p183 = por %p181, %p182
      %p184 = scmp.ne.s32.totalorder %s175, %s176
      %p185 = scmp.eq.s32.totalorder %s22, 0
      %p186 = por %p184, %p185
      %p187 = scmp.ne.s32.totalorder %s175, %s176
      %p188 = scmp.eq.s32.totalorder %s23, 1
      %p189 = por %p187, %p188
      %p191 = scmp.ne.s32.totalorder %s176, %s190
      %p192 = scmp.eq.s32.totalorder %s23, 0
      %p193 = por %p191, %p192
      %s194 = ssub.s32 %s24, %s36
      %s195 = ssub.s32 %s25, %s32
      %s196 = sor.u32 %s194, %s195
      %p197 = scmp.eq.s32.totalorder %s196, 0
      %s199 = sadd.s32 %s198, 1
      %s200 = scalar_select %p197, %s198, %s199
      %p203 = pneg %p197
      %p204 = scmp.eq.s32.totalorder %s17, 1
      %p205 = por %p203, %p204
      %p206 = scmp.ne.s32.totalorder %s198, %s201
      %p207 = scmp.eq.s32.totalorder %s17, 0
      %p208 = por %p206, %p207
      %p209 = scmp.ne.s32.totalorder %s198, %s201
      %p210 = scmp.eq.s32.totalorder %s22, 1
      %p211 = por %p209, %p210
      %p212 = scmp.ne.s32.totalorder %s201, %s202
      %p213 = scmp.eq.s32.totalorder %s22, 0
      %p214 = por %p212, %p213
      %p215 = scmp.ne.s32.totalorder %s201, %s202
      %p216 = scmp.eq.s32.totalorder %s23, 1
      %p217 = por %p215, %p216
      %p219 = scmp.ne.s32.totalorder %s202, %s218
      %p220 = scmp.eq.s32.totalorder %s23, 0
      %p221 = por %p219, %p220
      %s222 = ssub.s32 %s24, %s36
      %s223 = ssub.s32 %s25, %s32
      %s224 = sor.u32 %s222, %s223
      %p225 = scmp.eq.s32.totalorder %s224, 0
      %s227 = sadd.s32 %s226, 1
      %s228 = scalar_select %p225, %s226, %s227
      %p231 = pneg %p225
      %p232 = scmp.eq.s32.totalorder %s17, 1
      %p233 = por %p231, %p232
      %p234 = scmp.ne.s32.totalorder %s226, %s229
      %p235 = scmp.eq.s32.totalorder %s17, 0
      %p236 = por %p234, %p235
      %p237 = scmp.ne.s32.totalorder %s226, %s229
      %p238 = scmp.eq.s32.totalorder %s22, 1
      %p239 = por %p237, %p238
      %p240 = scmp.ne.s32.totalorder %s229, %s230
      %p241 = scmp.eq.s32.totalorder %s22, 0
      %p242 = por %p240, %p241
      %p243 = scmp.ne.s32.totalorder %s229, %s230
      %p244 = scmp.eq.s32.totalorder %s23, 1
      %p245 = por %p243, %p244
      %p247 = scmp.ne.s32.totalorder %s230, %s246
      %p248 = scmp.eq.s32.totalorder %s23, 0
      %p249 = por %p247, %p248
      %p250 = scmp.le.s32.totalorder 1, %s17
      %p251 = scmp.lt.s32.totalorder %s17, 3
      %p252 = pnand %p250, %p251
      %p253 = pneg %p252
      // Predicated region
      $region9: #{loab_forward.3} parent=5 // pred_check
        _
      $region10: #{loab_forward.3} parent=5 // pred_check_branch
        %255 = sbr.rel (%p252) target = $region12
      $region11: #{loab_forward.3} parent=5 // pred_region
        %s256 = ssub.s32 %s17, 1
        // Predicated region
        $region13: #{loab_forward.3} parent=11 // pred_check
          %p257 = pneg %p102
        $region14: #{loab_forward.3} parent=11 // pred_check_branch
          %259 = sbr.rel (%p257) target = $region16
        $region15: #{loab_forward.3} parent=11 // pred_region
          _
        $region16: #{loab_forward.3} parent=11 // pred_fallthru
          _
        // Predicated region
        $region17: #{loab_forward.3} parent=11 // pred_check
          %p260 = pneg %p123
        $region18: #{loab_forward.3} parent=11 // pred_check_branch
          %262 = sbr.rel (%p260) target = $region20
        $region19: #{loab_forward.3} parent=11 // pred_region
          _
        $region20: #{loab_forward.3} parent=11 // pred_fallthru
          _
        // Predicated region
        $region21: #{loab_forward.3} parent=11 // pred_check
          %p263 = pneg %p144
        $region22: #{loab_forward.3} parent=11 // pred_check_branch
          %265 = sbr.rel (%p263) target = $region24
        $region23: #{loab_forward.3} parent=11 // pred_region
          _
        $region24: #{loab_forward.3} parent=11 // pred_fallthru
          _
        // Predicated region
        $region25: #{loab_forward.3} parent=11 // pred_check
          %p266 = pneg %p165
        $region26: #{loab_forward.3} parent=11 // pred_check_branch
          %268 = sbr.rel (%p266) target = $region28
        $region27: #{loab_forward.3} parent=11 // pred_region
          _
        $region28: #{loab_forward.3} parent=11 // pred_fallthru
          _
        // Predicated region
        $region29: #{loab_forward.3} parent=11 // pred_check
          %p269 = pneg %p186
        $region30: #{loab_forward.3} parent=11 // pred_check_branch
          %271 = sbr.rel (%p269) target = $region32
        $region31: #{loab_forward.3} parent=11 // pred_region
          _
        $region32: #{loab_forward.3} parent=11 // pred_fallthru
          _
      $region12: #{loab_forward.3} parent=5 // pred_fallthru
        _
      %p272 = scmp.lt.s32.totalorder %s17, 2
      // Predicated region
      $region33: #{loab_forward.3} parent=5 // pred_check
        %p273 = pneg %p272
      $region34: #{loab_forward.3} parent=5 // pred_check_branch
        %275 = sbr.rel (%p273) target = $region36
      $region35: #{loab_forward.3} parent=5 // pred_region
        // Predicated region
        $region37: #{loab_forward.3} parent=35 // pred_check
          %p276 = pneg %p49
        $region38: #{loab_forward.3} parent=35 // pred_check_branch
          %278 = sbr.rel (%p276) target = $region40
        $region39: #{loab_forward.3} parent=35 // pred_region
          %p279 = scmp.lt.s32.totalorder %s24, 1
          %s280 = scalar_select %p279, %s24, 1
          %s281 = smul.addr %s280, 4
          %s282 = scalar_lea.vmem %s0, %s281
        $region40: #{loab_forward.3} parent=35 // pred_fallthru
          _
        // Predicated region
        $region41: #{loab_forward.3} parent=35 // pred_check
          %p283 = pneg %p75
        $region42: #{loab_forward.3} parent=35 // pred_check_branch
          %285 = sbr.rel (%p283) target = $region44
        $region43: #{loab_forward.3} parent=35 // pred_region
          %p286 = scmp.lt.s32.totalorder %s24, 1
          %s287 = scalar_select %p286, %s24, 1
          %s288 = smul.addr %s287, 4
          %s289 = scalar_lea.vmem %s1, %s288
        $region44: #{loab_forward.3} parent=35 // pred_fallthru
          _
        // Predicated region
        $region45: #{loab_forward.3} parent=35 // pred_check
          %p290 = pneg %p208
        $region46: #{loab_forward.3} parent=35 // pred_check_branch
          %292 = sbr.rel (%p290) target = $region48
        $region47: #{loab_forward.3} parent=35 // pred_region
          %p293 = scmp.lt.s32.totalorder %s24, 1
          %s294 = scalar_select %p293, %s24, 1
          %p295 = scmp.lt.s32.totalorder %s25, 0
          %s296 = scalar_select %p295, %s25, 0
          %s297 = sadd.s32 %s296, %s294
          %s298 = smul.addr %s297, 4
          %s299 = scalar_lea.vmem %s7, %s298
        $region48: #{loab_forward.3} parent=35 // pred_fallthru
          _
      $region36: #{loab_forward.3} parent=5 // pred_fallthru
        _
      %p300 = scmp.le.s32.totalorder 1, %s17
      %p301 = scmp.lt.s32.totalorder %s17, 3
      %p302 = pnand %p300, %p301
      %p303 = pneg %p302
      // Predicated region
      $region49: #{loab_forward.3} parent=5 // pred_check
        _
      $region50: #{loab_forward.3} parent=5 // pred_check_branch
        %305 = sbr.rel (%p302) target = $region52
      $region51: #{loab_forward.3} parent=5 // pred_region
        %s306 = ssub.s32 %s17, 1
        %p307 = scmp.lt.s32.totalorder %s26, 1
        %s308 = scalar_select %p307, %s26, 1
        %s309 = smul.addr %s308, 4
        %s310 = scalar_lea.vmem %s0, %s309
        %p311 = pneg %p55
        %p312 = pneg %p52
        %p313 = scmp.lt.s32.totalorder %s26, 1
        %s314 = scalar_select %p313, %s26, 1
        %s315 = smul.addr %s314, 4
        %s316 = scalar_lea.vmem %s1, %s315
        %p317 = pneg %p81
        %p318 = pneg %p78
        %p319 = pneg %p102
        %p320 = pneg %p99
        %p321 = pneg %p123
        %p322 = pneg %p120
        %p323 = pneg %p144
        %p324 = pneg %p141
        %p325 = pneg %p165
        %p326 = pneg %p162
        %p327 = pneg %p186
        %p328 = pneg %p183
        %p329 = scmp.lt.s32.totalorder %s26, 1
        %s330 = scalar_select %p329, %s26, 1
        %p331 = scmp.lt.s32.totalorder %s27, 0
        %s332 = scalar_select %p331, %s27, 0
        %s333 = sadd.s32 %s332, %s330
        %s334 = smul.addr %s333, 4
        %s335 = scalar_lea.vmem %s7, %s334
        %p336 = pneg %p214
        %p337 = pneg %p211
        %p338 = pneg %p242
        %p339 = pneg %p239
        %s340 = sand.u32 %s229, 1
        %s341 = scalar_lea.sflag [#allocation4], %s340
        %s342 = sand.u32 %s229, 1
        %s343 = smul.addr %s342, 4
        %s344 = scalar_lea.vmem [#allocation3], %s343
        %p345 = scmp.lt.s32.totalorder %s26, 1
        %s346 = scalar_select %p345, %s26, 1
        %s347 = smul.addr %s346, 4
        %s348 = scalar_lea.vmem %s0, %s347
        %p349 = scmp.lt.s32.totalorder %s26, 1
        %s350 = scalar_select %p349, %s26, 1
        %s351 = smul.addr %s350, 4
        %s352 = scalar_lea.vmem %s1, %s351
        %p353 = scmp.lt.s32.totalorder %s26, 1
        %s354 = scalar_select %p353, %s26, 1
        %p355 = scmp.lt.s32.totalorder %s27, 0
        %s356 = scalar_select %p355, %s27, 0
        %s357 = sadd.s32 %s356, %s354
        %s358 = smul.addr %s357, 4
        %s359 = scalar_lea.vmem %s7, %s358
        %p360 = scmp.eq.s32.totalorder %s27, 0
        // Predicated region
        $region53: #{loab_forward.3} parent=51 // pred_check
          %p361 = pneg %p360
        $region54: #{loab_forward.3} parent=51 // pred_check_branch
          %363 = sbr.rel (%p361) target = $region56
        $region55: #{loab_forward.3} parent=51 // pred_region
          %v364 = vld [vmem:[%s348] sm:$0xf]
          %v365 = vmul.f32 %v364, 0.0625
          %v366 = vld [vmem:[%s2] sm:$0xf]
          %v367 = vadd.f32 %v365, %v366
          %v368 = vld [vmem:[%s352] sm:$0xf]
          %v369 = vadd.f32 %v368, %v366
          %v370 = vld [vmem:[%s3] sm:$0x3]
          %v371 = vld [vmem:[%s4] sm:$0x3]
          %vm372 = vcmask 31744
          %v374 = vsel %vm372, %v370, 0
          %vm376 = vcmask 1043456
          %v378 = vsel %vm376, %v367, 0
          %380 = vmatpush.msra.mxu0 0.0
          %381 = vmatpush.msra.mxu0 0.0
          %382 = vmatpush.msra.mxu0 0.0
          %383 = vmatpush.msra.mxu0 0.0
          %384 = vmatpush.msra.mxu0 0.0
          %385 = vmatpush.msra.mxu0 0.0
          %386 = vmatpush.msra.mxu0 0.0
          %387 = vmatpush.msra.mxu0 0.0
          %388 = vmatpush.msra.mxu0 0.0
          %389 = vmatpush.msra.mxu0 0.0
          %390 = vmatpush.msra.mxu0 0.0
          %391 = vmatpush.msra.mxu0 0.0
          %392 = vmatpush.msra.mxu0 0.0
          %393 = vmatpush.msra.mxu0 0.0
          %394 = vmatpush.msra.mxu0 0.0
          %395 = vmatpush.msra.mxu0 %v378
          %396 = vmatmul.f32.gmra.mxu0 %v374
          %v397 = vpop.f32.mrf.mxu0
          %v398 = vadd.f32 %v371, %v397
          %399 = vdwg.mxu0
          %v400 = vmax.f32 %v398, 0.0
          %v401 = vld [vmem:[%s5] sm:$0xf]
          %v402 = vld [vmem:[%s6] sm:$0xf]
          %vm403 = vcmask 15360
          %v405 = vsel %vm403, %v401, 0
          %vm407 = vcmask 1041408
          %v409 = vsel %vm407, %v400, 0
          %411 = vmatpush.msra.mxu0 0.0
          %412 = vmatpush.msra.mxu0 0.0
          %413 = vmatpush.msra.mxu0 0.0
          %414 = vmatpush.msra.mxu0 0.0
          %415 = vmatpush.msra.mxu0 0.0
          %416 = vmatpush.msra.mxu0 0.0
          %417 = vmatpush.msra.mxu0 0.0
          %418 = vmatpush.msra.mxu0 0.0
          %419 = vmatpush.msra.mxu0 0.0
          %420 = vmatpush.msra.mxu0 0.0
          %421 = vmatpush.msra.mxu0 0.0
          %422 = vmatpush.msra.mxu0 0.0
          %423 = vmatpush.msra.mxu0 0.0
          %424 = vmatpush.msra.mxu0 0.0
          %425 = vmatpush.msra.mxu0 0.0
          %426 = vmatpush.msra.mxu0 %v409
          %427 = vmatmul.f32.gmra.mxu0 %v405
          %v428 = vpop.f32.mrf.mxu0
          %v429 = vadd.f32 %v402, %v428
          %430 = vdwg.mxu0
          %v432 = vsel %vm376, %v369, 0
          %434 = vmatpush.msra.mxu0 0.0
          %435 = vmatpush.msra.mxu0 0.0
          %436 = vmatpush.msra.mxu0 0.0
          %437 = vmatpush.msra.mxu0 0.0
          %438 = vmatpush.msra.mxu0 0.0
          %439 = vmatpush.msra.mxu0 0.0
          %440 = vmatpush.msra.mxu0 0.0
          %441 = vmatpush.msra.mxu0 0.0
          %442 = vmatpush.msra.mxu0 0.0
          %443 = vmatpush.msra.mxu0 0.0
          %444 = vmatpush.msra.mxu0 0.0
          %445 = vmatpush.msra.mxu0 0.0
          %446 = vmatpush.msra.mxu0 0.0
          %447 = vmatpush.msra.mxu0 0.0
          %448 = vmatpush.msra.mxu0 0.0
          %449 = vmatpush.msra.mxu0 %v432
          %450 = vmatmul.f32.gmra.mxu0 %v374
          %v451 = vpop.f32.mrf.mxu0
          %v452 = vadd.f32 %v371, %v451
          %453 = vdwg.mxu0
          %v454 = vmax.f32 %v452, 0.0
          %v456 = vsel %vm407, %v454, 0
          %458 = vmatpush.msra.mxu0 0.0
          %459 = vmatpush.msra.mxu0 0.0
          %460 = vmatpush.msra.mxu0 0.0
          %461 = vmatpush.msra.mxu0 0.0
          %462 = vmatpush.msra.mxu0 0.0
          %463 = vmatpush.msra.mxu0 0.0
          %464 = vmatpush.msra.mxu0 0.0
          %465 = vmatpush.msra.mxu0 0.0
          %466 = vmatpush.msra.mxu0 0.0
          %467 = vmatpush.msra.mxu0 0.0
          %468 = vmatpush.msra.mxu0 0.0
          %469 = vmatpush.msra.mxu0 0.0
          %470 = vmatpush.msra.mxu0 0.0
          %471 = vmatpush.msra.mxu0 0.0
          %472 = vmatpush.msra.mxu0 0.0
          %473 = vmatpush.msra.mxu0 %v456
          %474 = vmatmul.f32.gmra.mxu0 %v405
          %v475 = vpop.f32.mrf.mxu0
          %v476 = vadd.f32 %v402, %v475
          %477 = vdwg.mxu0
          %v478 = vadd.f32 %v429, %v476
          %v479 = vxor.u32 %v478, 2147483648
          %v480 = vmul.f32 %v479, 1.442695
          %v481 = vpow.pop %v480
          %v482 = vadd.f32 %v481, 1.0
          %v483 = vrcp.pop %v482
          %v484 = vmul.f32 %v482, %v483
          %v485 = vsub.f32 1.0, %v484
          %v486 = vmul.f32 %v483, %v485
          %v487 = vadd.f32 %v483, %v486
          %vm488 = vweird.f32 %v482
          %vm489 = vweird.f32 %v483
          %vm490 = vmor %vm488, %vm489
          %v491 = vsel %vm490, %v483, %v487
          %v492 = vand.u32 2147483647, %v482
          %vm493 = vcmp.eq.f32.partialorder %v492, 8.507059e+37
          %v494 = vand.u32 %v482, 2147483648
          %v495 = vor.u32 1.1754944e-38, %v494
          %v496 = vsel %vm493, %v495, %v491
          %v497 = vmul.f32 1.0, %v496
          %vm498 = vcmask 3072
          %499 = vst.msk [vmem:[#allocation2] sm:$0xf] %vm498, %v497
        $region56: #{loab_forward.3} parent=51 // pred_fallthru
          _
        %v500 = vld [vmem:[%s359] sm:$0xf]
        %v501 = vld [vmem:[#allocation2] sm:$0xf]
        %503 = vset.pattern.permute.xlu0 0
        %504 = vperm.xlu0 %503, %v501
        %v505 = vpop.permute.xlu0 %504
        %v507 = vadd.f32 %v500, %v505
        %vm508 = vcmask 125952
        %509 = vst.msk [vmem:[%s344] sm:$0xf] %vm508, %v507
        %s510 = sand.u32 %s229, 1
        %s511 = scalar_lea.sflag [#allocation4], %s510
        %s512 = sand.u32 %s229, 1
        %s513 = smul.addr %s512, 4
        %s514 = scalar_lea.vmem [#allocation3], %s513
        // Predicated region
        $region57: #{loab_forward.3} parent=51 // pred_check
          %p515 = pneg %p239
        $region58: #{loab_forward.3} parent=51 // pred_check_branch
          %517 = sbr.rel (%p515) target = $region60
        $region59: #{loab_forward.3} parent=51 // pred_region
          %519 = vsyncadd %s511, 0
          %s520 = sadd.s32 %s27, %s26
          %s521 = smul.addr %s520, 4
          %s522 = scalar_lea.hbm %s8, %s521
          %s524 = sshll.u32 %s514, 4
          %s525 = int_to_ptr.vmem [resolvable:$true] %s524
          %s526 = sshll.u32 %s522, 4
          %s527 = int_to_ptr.hbm [resolvable:$true] %s526
          %529 = dma.vmem_to_hbm [thread:$0]  %s525, 64, %s527, %s511
        $region60: #{loab_forward.3} parent=51 // pred_fallthru
          _
      $region52: #{loab_forward.3} parent=5 // pred_fallthru
        _
      %p530 = scmp.le.s32.totalorder 2, %s17
      // Predicated region
      $region61: #{loab_forward.3} parent=5 // pred_check
        %p531 = pneg %p530
      $region62: #{loab_forward.3} parent=5 // pred_check_branch
        %533 = sbr.rel (%p531) target = $region64
      $region63: #{loab_forward.3} parent=5 // pred_region
        %s534 = ssub.s32 %s17, 2
        // Predicated region
        $region65: #{loab_forward.3} parent=63 // pred_check
          %p535 = pneg %p245
        $region66: #{loab_forward.3} parent=63 // pred_check_branch
          %537 = sbr.rel (%p535) target = $region68
        $region67: #{loab_forward.3} parent=63 // pred_region
          %s538 = sand.u32 %s230, 1
          %s539 = scalar_lea.sflag [#allocation4], %s538
          %s540 = sand.u32 %s230, 1
          %s541 = smul.addr %s540, 4
          %s542 = scalar_lea.vmem [#allocation3], %s541
          %544 = dma.done %s539, 64
        $region68: #{loab_forward.3} parent=63 // pred_fallthru
          _
      $region64: #{loab_forward.3} parent=5 // pred_fallthru
        _
    $region6: #{loab_forward.3} parent=1 // loop_footer
      %s21 = sadd.s32 1, %s17
    $region7: #{loab_forward.3} parent=1 // loop_footer_branch
      %16 = sbr.rel target = $region3
    $region8: #{loab_forward.3} parent=1 // loop_exit
      _
    %545 = vsyncpa [#allocation4], 1
    %s546 = scalar_lea.sflag [#allocation4], 1
    %547 = vsyncpa %s546, 1

</llo_original>
